<compile_context>
chip_gen: v7x
topology: tpu7x:2x2x1
jax: 0.10.0
libtpu: 0.0.40
codegen_flags: <defaults>
</compile_context>

<pallas_src>
import jax
import jax.numpy as jnp
import numpy as np
from jax import lax
from jax.experimental import pallas as pl
from jax.experimental.pallas import tpu as pltpu

# ------------------------- config (small, consistent with the module) -------------------------
B = 2           # batch
N = 16          # input points per cloud
C_FEAT = 4      # per-point feature channels
NPOINT = 8      # self.npoint (FPS centers)
RADIUS = 0.4
NSAMPLE = 8     # samples per ball
H1, H2 = 16, 32                     # SharedMLP = [C_FEAT+3, H1, H2]
C_IN = C_FEAT + 3                   # use_xyz=True -> concat relative xyz (= 7)
BN_EPS = 1e-5

LANE = 128                          # lane-dense padded channel width
K1 = C_IN + 1                       # 8: input channels + ones column (bias fold)
BP = B * NPOINT                     # 16 rows per sample block
ROWS = NSAMPLE * BP                 # 128 rows total (sample-major slab)


# ------------------------------------ Pallas kernel ------------------------------------
def _sa_mlp_maxpool_kernel(x_ref, w1_ref, w2_ref, out_ref):
    # x_ref: (ROWS, K1) with row = s*(B*NPOINT) + b*NPOINT + p, last column == 1.0
    # w1_ref: (K1, LANE)  -- conv1+BN folded, bias in last row, col H1 carries a 1-column
    # w2_ref: (LANE, LANE)-- conv2+BN folded, bias in row H1
    x = x_ref[...]
    h = jnp.maximum(jnp.dot(x, w1_ref[...], preferred_element_type=jnp.float32), 0.0)
    h = jnp.maximum(jnp.dot(h, w2_ref[...], preferred_element_type=jnp.float32), 0.0)
    # max_pool2d(kernel=[1, nsample]): log-depth tree max over NSAMPLE contiguous
    # (B*NPOINT, LANE) row blocks (each a whole multiple of the (8,128) tile).
    m = h
    n_blk = NSAMPLE
    while n_blk > 1:
        n_blk //= 2
        m = jnp.maximum(m[: n_blk * BP], m[n_blk * BP: 2 * n_blk * BP])
    out_ref[...] = m                                                   # (B*NPOINT, LANE)


def sa_mlp_maxpool(x_slab, w1p, w2p):
    """x_slab: (ROWS, K1) -> pooled (B*NPOINT, LANE) (lane-padded, cols >= H2 are zero)."""
    return pl.pallas_call(
        _sa_mlp_maxpool_kernel,
        out_shape=jax.ShapeDtypeStruct((BP, LANE), jnp.float32),
        grid=(1,),
        in_specs=[
            pl.BlockSpec((ROWS, K1), lambda i: (0, 0)),
            pl.BlockSpec((K1, LANE), lambda i: (0, 0)),
            pl.BlockSpec((LANE, LANE), lambda i: (0, 0)),
        ],
        out_specs=pl.BlockSpec((BP, LANE), lambda i: (0, 0)),
        compiler_params=pltpu.CompilerParams(dimension_semantics=("arbitrary",)),
    )(x_slab, w1p, w2p)


# ------------------------------------ JAX glue ------------------------------------
def furthest_point_sample(xyz, npoint):
    """xyz: (B, N, 3) -> int32 indices (B, npoint). Matches the standard CUDA FPS (seed idx 0)."""
    def single(pts):
        n = pts.shape[0]
        def body(i, carry):
            inds, dist, last = carry
            d = jnp.sum((pts - pts[last]) ** 2, axis=-1)
            dist = jnp.minimum(dist, d)
            nxt = jnp.argmax(dist).astype(jnp.int32)
            inds = inds.at[i].set(last)
            return inds, dist, nxt
        inds0 = jnp.zeros((npoint,), jnp.int32)
        dist0 = jnp.full((n,), 1e10, jnp.float32)
        inds, _, _ = lax.fori_loop(0, npoint, body, (inds0, dist0, jnp.int32(0)))
        return inds
    return jax.vmap(single)(xyz)


def ball_query(radius, nsample, xyz, new_xyz):
    """xyz: (B,N,3), new_xyz: (B,S,3) -> int32 idx (B,S,nsample) (pad with first hit).
       NOTE: centers with zero in-radius neighbors fall back to global point index 0
       (matches the common CUDA init-to-0 behavior)."""
    d2 = jnp.sum((new_xyz[:, :, None, :] - xyz[:, None, :, :]) ** 2, axis=-1)   # (B,S,N)
    n = xyz.shape[1]
    key = jnp.where(d2 < radius * radius, jnp.arange(n)[None, None, :], n)
    srt = jnp.sort(key, axis=-1)[..., :nsample]
    first = srt[..., :1]
    idx = jnp.where(srt == n, first, srt)
    idx = jnp.where(idx == n, 0, idx)
    return idx.astype(jnp.int32)


def query_and_group(xyz, new_xyz, features, idx):
    """Returns channels-last grouped tensor (B, NPOINT, NSAMPLE, 3 + C_FEAT)."""
    grouped_xyz = jax.vmap(lambda pts, ind: pts[ind])(xyz, idx)            # (B,P,S,3)
    grouped_xyz = grouped_xyz - new_xyz[:, :, None, :]
    grouped_feat = jax.vmap(lambda f, ind: f[:, ind])(features, idx)       # (B,C,P,S)
    grouped_feat = jnp.transpose(grouped_feat, (0, 2, 3, 1))               # (B,P,S,C)
    return jnp.concatenate([grouped_xyz, grouped_feat], axis=-1)           # (B,P,S,3+C)


def fold_bn(w, bias, gamma, beta, mean, var, eps):
    """Fold Conv2d(1x1) + BatchNorm(eval) into a single (Cin, Cout) weight and (1, Cout) bias."""
    scale = gamma / jnp.sqrt(var + eps)                                    # (Cout,)
    w_f = (w * scale[:, None]).T                                           # (Cin, Cout)
    b_f = ((bias - mean) * scale + beta)[None, :]                          # (1, Cout)
    return w_f.astype(jnp.float32), b_f.astype(jnp.float32)


def pad_params(w1, b1, w2, b2):
    """Lane-pad to 128 and fold both biases into the weights.
       x gets a trailing ones column; w1p's last row carries b1 and puts a 1 into
       column H1 so that relu(h)[:, H1] == 1 carries b2 through w2p's row H1."""
    w1p = jnp.zeros((K1, LANE), jnp.float32)
    w1p = w1p.at[:C_IN, :H1].set(w1)
    w1p = w1p.at[C_IN, :H1].set(b1[0])
    w1p = w1p.at[C_IN, H1].set(1.0)
    w2p = jnp.zeros((LANE, LANE), jnp.float32)
    w2p = w2p.at[:H1, :H2].set(w2)
    w2p = w2p.at[H1, :H2].set(b2[0])
    return w1p, w2p


def pointnet_sa_forward(xyz, features, params, return_inds=False):
    """Mirrors _PointnetSAModuleBase.forward with one grouper / one MLP.
       xyz: (B,N,3) float32, features: (B,C_FEAT,N) float32.
       Returns (new_xyz (B,NPOINT,3), new_features (B,H2,NPOINT)[, inds])."""
    inds = furthest_point_sample(xyz, NPOINT)                              # (B,NPOINT)
    new_xyz = jnp.take_along_axis(xyz, inds[:, :, None], axis=1)           # (B,NPOINT,3)

    idx = ball_query(RADIUS, NSAMPLE, xyz, new_xyz)                        # (B,NPOINT,NSAMPLE)
    grouped = query_and_group(xyz, new_xyz, features, idx)                 # (B,P,S,7)

    # sample-major slab: row = s*(B*NPOINT) + b*NPOINT + p, plus a ones column -> (128, 8)
    gs = jnp.transpose(grouped, (2, 0, 1, 3))                              # (S,B,P,7)
    ones = jnp.ones(gs.shape[:-1] + (1,), jnp.float32)
    x_slab = jnp.concatenate([gs, ones], axis=-1).reshape(ROWS, K1)

    w1p, w2p = params
    pooled = sa_mlp_maxpool(x_slab, w1p, w2p)                              # (B*P, 128)
    new_features = jnp.transpose(
        pooled.reshape(B, NPOINT, LANE)[:, :, :H2], (0, 2, 1))             # (B, H2, NPOINT)
    if return_inds:
        return new_xyz, new_features, inds
    return new_xyz, new_features


# ------------------------------------ main ------------------------------------
if __name__ == "__main__":
    key = jax.random.PRNGKey(0)
    k_xyz, k_feat, k_w1, k_b1, k_w2, k_b2 = jax.random.split(key, 6)

    xyz = jax.random.uniform(k_xyz, (B, N, 3), dtype=jnp.float32)          # point coords
    features = jax.random.normal(k_feat, (B, C_FEAT, N), dtype=jnp.float32)

    # Deterministic synthetic parameters (Conv2d 1x1 + BatchNorm, eval mode), then folded.
    conv1_w = jax.random.normal(k_w1, (H1, C_IN), dtype=jnp.float32) * 0.2
    conv1_b = jax.random.normal(k_b1, (H1,), dtype=jnp.float32) * 0.05
    conv2_w = jax.random.normal(k_w2, (H2, H1), dtype=jnp.float32) * 0.2
    conv2_b = jax.random.normal(k_b2, (H2,), dtype=jnp.float32) * 0.05
    bn1_g = 1.0 + 0.05 * jnp.arange(H1, dtype=jnp.float32)
    bn1_b = 0.01 * jnp.arange(H1, dtype=jnp.float32)
    bn1_m = 0.02 * jnp.arange(H1, dtype=jnp.float32)
    bn1_v = 1.0 + 0.1 * jnp.arange(H1, dtype=jnp.float32)
    bn2_g = 1.0 + 0.03 * jnp.arange(H2, dtype=jnp.float32)
    bn2_b = -0.01 * jnp.arange(H2, dtype=jnp.float32)
    bn2_m = 0.01 * jnp.arange(H2, dtype=jnp.float32)
    bn2_v = 1.0 + 0.05 * jnp.arange(H2, dtype=jnp.float32)
    # TODO(synk): BatchNorm is folded in eval mode (running stats); training-mode batch stats not emulated.

    w1, b1 = fold_bn(conv1_w, conv1_b, bn1_g, bn1_b, bn1_m, bn1_v, BN_EPS)
    w2, b2 = fold_bn(conv2_w, conv2_b, bn2_g, bn2_b, bn2_m, bn2_v, BN_EPS)
    params = pad_params(w1, b1, w2, b2)

    new_xyz, new_features, inds = jax.jit(
        lambda a, b: pointnet_sa_forward(a, b, params, return_inds=True)
    )(xyz, features)
    jax.block_until_ready((new_xyz, new_features, inds))

    # Pure-JAX reference (unpadded folded params, same grouping).
    inds_ref = furthest_point_sample(xyz, NPOINT)
    new_xyz_ref = jnp.take_along_axis(xyz, inds_ref[:, :, None], axis=1)
    idx_ref = ball_query(RADIUS, NSAMPLE, xyz, new_xyz_ref)
    grouped_ref = query_and_group(xyz, new_xyz_ref, features, idx_ref)     # (B,P,S,7)
    h = jnp.maximum(jnp.einsum("bpsc,ch->bpsh", grouped_ref, w1) + b1[0], 0.0)
    h = jnp.maximum(jnp.einsum("bpsh,hk->bpsk", h, w2) + b2[0], 0.0)
    ref = jnp.transpose(jnp.max(h, axis=2), (0, 2, 1))                     # (B,H2,NPOINT)

    np.testing.assert_allclose(np.asarray(new_features), np.asarray(ref), rtol=1e-5, atol=1e-5)
    np.testing.assert_allclose(np.asarray(new_xyz), np.asarray(new_xyz_ref), rtol=0, atol=0)
    assert new_xyz.shape == (B, NPOINT, 3)
    assert new_features.shape == (B, H2, NPOINT)
    assert inds.shape == (B, NPOINT)
    print("KERNEL_OK")
</pallas_src>

<mosaic_0001>
module attributes {stable_mosaic.version = 11 : i64} {
  func.func @_sa_mlp_maxpool_kernel(%arg0: i32, %arg1: memref<128x8xf32, #tpu.memory_space<vmem>>, %arg2: memref<8x128xf32, #tpu.memory_space<vmem>>, %arg3: memref<128x128xf32, #tpu.memory_space<vmem>>, %arg4: memref<16x128xf32, #tpu.memory_space<vmem>>) attributes {dimension_semantics = [#tpu.dimension_semantics<arbitrary>], iteration_bounds = array<i64: 1>, scalar_prefetch = 0 : i64, scratch_operands = 0 : i64, tpu.core_type = #tpu.core_type<tc>, window_params = [{pipeline_mode = #tpu.pipeline_mode<synchronous>, transform_indices = @transform_0, window_bounds = array<i64: 128, 8>}, {pipeline_mode = #tpu.pipeline_mode<synchronous>, transform_indices = @transform_1, window_bounds = array<i64: 8, 128>}, {pipeline_mode = #tpu.pipeline_mode<synchronous>, transform_indices = @transform_2, window_bounds = array<i64: 128, 128>}, {pipeline_mode = #tpu.pipeline_mode<synchronous>, transform_indices = @transform_3, window_bounds = array<i64: 16, 128>}]} {
    %c0 = arith.constant 0 : index
    %c0_0 = arith.constant 0 : index
    %0 = vector.load %arg1[%c0, %c0_0] : memref<128x8xf32, #tpu.memory_space<vmem>>, vector<128x8xf32>
    %c0_1 = arith.constant 0 : index
    %c0_2 = arith.constant 0 : index
    %1 = vector.load %arg2[%c0_1, %c0_2] : memref<8x128xf32, #tpu.memory_space<vmem>>, vector<8x128xf32>
    %cst = arith.constant dense<0.000000e+00> : vector<128x128xf32>
    %2 = tpu.matmul %0, %1, %cst {dimension_numbers = #tpu.dot_dimension_numbers<[1], [0], [0], [1], [0, 0, 1, 1], [], []>} : vector<128x8xf32>, vector<8x128xf32>, vector<128x128xf32> -> vector<128x128xf32>
    %cst_3 = arith.constant 0.000000e+00 : f32
    %3 = vector.broadcast %cst_3 : f32 to vector<128x128xf32>
    %4 = arith.maximumf %2, %3 : vector<128x128xf32>
    %c0_4 = arith.constant 0 : index
    %c0_5 = arith.constant 0 : index
    %5 = vector.load %arg3[%c0_4, %c0_5] : memref<128x128xf32, #tpu.memory_space<vmem>>, vector<128x128xf32>
    %cst_6 = arith.constant dense<0.000000e+00> : vector<128x128xf32>
    %6 = tpu.matmul %4, %5, %cst_6 {dimension_numbers = #tpu.dot_dimension_numbers<[1], [0], [0], [1], [0, 0, 1, 1], [], []>} : vector<128x128xf32>, vector<128x128xf32>, vector<128x128xf32> -> vector<128x128xf32>
    %cst_7 = arith.constant 0.000000e+00 : f32
    %7 = vector.broadcast %cst_7 : f32 to vector<128x128xf32>
    %8 = arith.maximumf %6, %7 : vector<128x128xf32>
    %9 = vector.extract_strided_slice %8 {offsets = [0, 0], sizes = [64, 128], strides = [1, 1]} : vector<128x128xf32> to vector<64x128xf32>
    %10 = vector.extract_strided_slice %8 {offsets = [64, 0], sizes = [64, 128], strides = [1, 1]} : vector<128x128xf32> to vector<64x128xf32>
    %11 = arith.maximumf %9, %10 : vector<64x128xf32>
    %12 = vector.extract_strided_slice %11 {offsets = [0, 0], sizes = [32, 128], strides = [1, 1]} : vector<64x128xf32> to vector<32x128xf32>
    %13 = vector.extract_strided_slice %11 {offsets = [32, 0], sizes = [32, 128], strides = [1, 1]} : vector<64x128xf32> to vector<32x128xf32>
    %14 = arith.maximumf %12, %13 : vector<32x128xf32>
    %15 = vector.extract_strided_slice %14 {offsets = [0, 0], sizes = [16, 128], strides = [1, 1]} : vector<32x128xf32> to vector<16x128xf32>
    %16 = vector.extract_strided_slice %14 {offsets = [16, 0], sizes = [16, 128], strides = [1, 1]} : vector<32x128xf32> to vector<16x128xf32>
    %17 = arith.maximumf %15, %16 : vector<16x128xf32>
    %c0_8 = arith.constant 0 : index
    %c0_9 = arith.constant 0 : index
    %18 = vector.load %arg4[%c0_8, %c0_9] : memref<16x128xf32, #tpu.memory_space<vmem>>, vector<16x128xf32>
    tpu.vector_store %arg4[%c0_8, %c0_9], %17 {strides = array<i32>} : memref<16x128xf32, #tpu.memory_space<vmem>>, vector<16x128xf32>,
    return
  }
  func.func @transform_0(%arg0: i32) -> (i32, i32) {
    %c0_i32 = arith.constant 0 : i32
    %c0_i32_0 = arith.constant 0 : i32
    %c0_i32_1 = arith.constant 0 : i32
    return %c0_i32, %c0_i32_0 : i32, i32
  }
  func.func @transform_1(%arg0: i32) -> (i32, i32) {
    %c0_i32 = arith.constant 0 : i32
    %c0_i32_0 = arith.constant 0 : i32
    %c0_i32_1 = arith.constant 0 : i32
    return %c0_i32, %c0_i32_0 : i32, i32
  }
  func.func @transform_2(%arg0: i32) -> (i32, i32) {
    %c0_i32 = arith.constant 0 : i32
    %c0_i32_0 = arith.constant 0 : i32
    %c0_i32_1 = arith.constant 0 : i32
    return %c0_i32, %c0_i32_0 : i32, i32
  }
  func.func @transform_3(%arg0: i32) -> (i32, i32) {
    %c0_i32 = arith.constant 0 : i32
    %c0_i32_0 = arith.constant 0 : i32
    %c0_i32_1 = arith.constant 0 : i32
    return %c0_i32, %c0_i32_0 : i32, i32
  }
}

</mosaic_0001>

<llo_original>
// kernel: custom-call.8
$region0: #{custom-call.8}
  %s0 = inlined_call_operand.vmem [shape: f32[2,16], index: 0, kind: output, shape index: {}]

// kernel: _lambda_.1
$region0: #{_lambda_.1}
  #allocation0 [shape = 'u32[]', space=smem, size = 0x4, offset = 0x4, fixed_abs, tag = 'smem constant byte address 0x4 - core index']
  #allocation1 [shape = 'u32[144,128]{1,0:T(1,128)}', space=vmem, size = 0x12000, scoped, tag = 'internal scratch']
  %s0 = inlined_call_operand.vmem [shape: f32[128,8], index: 0, kind: input, shape index: {}]
  %s1 = inlined_call_operand.vmem [shape: f32[8,128], index: 1, kind: input, shape index: {}]
  %s2 = inlined_call_operand.vmem [shape: f32[128,128], index: 2, kind: input, shape index: {}]
  %s3 = inlined_call_operand.vmem [shape: f32[16,128], index: 3, kind: output, shape index: {}]
  %s4 = sld [smem:[#allocation0]]
  $region22: #{_lambda_.1} parent=0
    _
  %s6 = ssub.s32 1, %s4
  %s7 = scalar_select 0, %s6, %s4
  // Predicated region
  $region2: #{_lambda_.1} parent=0 // pred_check
    _
  $region3: #{_lambda_.1} parent=0 // pred_check_branch
    %9 = sbr.rel (0) target = $region5
  $region4: #{_lambda_.1} parent=0 // pred_region
    _
  $region5: #{_lambda_.1} parent=0 // pred_fallthru
    _
  // Predicated region
  $region6: #{_lambda_.1} parent=0 // pred_check
    _
  $region7: #{_lambda_.1} parent=0 // pred_check_branch
    %11 = sbr.rel (0) target = $region9
  $region8: #{_lambda_.1} parent=0 // pred_region
    _
  $region9: #{_lambda_.1} parent=0 // pred_fallthru
    _
  // Predicated region
  $region10: #{_lambda_.1} parent=0 // pred_check
    _
  $region11: #{_lambda_.1} parent=0 // pred_check_branch
    %13 = sbr.rel (0) target = $region13
  $region12: #{_lambda_.1} parent=0 // pred_region
    _
  $region13: #{_lambda_.1} parent=0 // pred_fallthru
    _
  %v14 = vld [vmem:[%s0] sm:$0xff]
  %v15 = vld [vmem:[%s0 + $0x8] sm:$0xff]
  %v16 = vld [vmem:[%s0 + $0x10] sm:$0xff]
  %v17 = vld [vmem:[%s0 + $0x18] sm:$0xff]
  %v18 = vld [vmem:[%s0 + $0x20] sm:$0xff]
  %v19 = vld [vmem:[%s0 + $0x28] sm:$0xff]
  %v20 = vld [vmem:[%s0 + $0x30] sm:$0xff]
  %v21 = vld [vmem:[%s0 + $0x38] sm:$0xff]
  %v22 = vld [vmem:[%s0 + $0x40] sm:$0xff]
  %v23 = vld [vmem:[%s0 + $0x48] sm:$0xff]
  %v24 = vld [vmem:[%s0 + $0x50] sm:$0xff]
  %v25 = vld [vmem:[%s0 + $0x58] sm:$0xff]
  %v26 = vld [vmem:[%s0 + $0x60] sm:$0xff]
  %v27 = vld [vmem:[%s0 + $0x68] sm:$0xff]
  %v28 = vld [vmem:[%s0 + $0x70] sm:$0xff]
  %v29 = vld [vmem:[%s0 + $0x78] sm:$0xff]
  %v30 = vld [vmem:[%s1] sm:$0xff]
  %vm31 = vcmask 64512
  %v33 = vsel %vm31, %v14, 0
  %v36 = vsel %vm31, %v15, 0
  %v39 = vsel %vm31, %v16, 0
  %v42 = vsel %vm31, %v17, 0
  %v45 = vsel %vm31, %v18, 0
  %v48 = vsel %vm31, %v19, 0
  %v51 = vsel %vm31, %v20, 0
  %v54 = vsel %vm31, %v21, 0
  %v57 = vsel %vm31, %v22, 0
  %v60 = vsel %vm31, %v23, 0
  %v63 = vsel %vm31, %v24, 0
  %v66 = vsel %vm31, %v25, 0
  %v69 = vsel %vm31, %v26, 0
  %v72 = vsel %vm31, %v27, 0
  %v75 = vsel %vm31, %v28, 0
  %v78 = vsel %vm31, %v29, 0
  %80 = vmatprep.subr.mxu0 0.0
  %81 = vmatpush1.msra.mxu0 %v30
  %82 = vmatprep.subr.mxu0 0.0
  %83 = vmatpush1.msra.mxu0 0.0
  %84 = vmatprep.subr.mxu0 0.0
  %85 = vmatpush1.msra.mxu0 0.0
  %86 = vmatprep.subr.mxu0 0.0
  %87 = vmatpush1.msra.mxu0 0.0
  %88 = vmatprep.subr.mxu0 0.0
  %89 = vmatpush1.msra.mxu0 0.0
  %90 = vmatprep.subr.mxu0 0.0
  %91 = vmatpush1.msra.mxu0 0.0
  %92 = vmatprep.subr.mxu0 0.0
  %93 = vmatpush1.msra.mxu0 0.0
  %94 = vmatprep.subr.mxu0 0.0
  %95 = vmatpush1.msra.mxu0 0.0
  %96 = vmatprep.subr.mxu0 0.0
  %97 = vmatpush1.msra.mxu0 0.0
  %98 = vmatprep.subr.mxu0 0.0
  %99 = vmatpush1.msra.mxu0 0.0
  %100 = vmatprep.subr.mxu0 0.0
  %101 = vmatpush1.msra.mxu0 0.0
  %102 = vmatprep.subr.mxu0 0.0
  %103 = vmatpush1.msra.mxu0 0.0
  %104 = vmatprep.subr.mxu0 0.0
  %105 = vmatpush1.msra.mxu0 0.0
  %106 = vmatprep.subr.mxu0 0.0
  %107 = vmatpush1.msra.mxu0 0.0
  %108 = vmatprep.subr.mxu0 0.0
  %109 = vmatpush1.msra.mxu0 0.0
  %110 = vmatprep.subr.mxu0 0.0
  %111 = vmatpush1.msra.mxu0 0.0
  %112 = vmatprep.subr.mxu0 0.0
  %113 = vmatpush1.msra.mxu0 0.0
  %114 = vmatprep.subr.mxu0 0.0
  %115 = vmatpush1.msra.mxu0 0.0
  %116 = vmatprep.subr.mxu0 0.0
  %117 = vmatpush1.msra.mxu0 0.0
  %118 = vmatprep.subr.mxu0 0.0
  %119 = vmatpush1.msra.mxu0 0.0
  %120 = vmatprep.subr.mxu0 0.0
  %121 = vmatpush1.msra.mxu0 0.0
  %122 = vmatprep.subr.mxu0 0.0
  %123 = vmatpush1.msra.mxu0 0.0
  %124 = vmatprep.subr.mxu0 0.0
  %125 = vmatpush1.msra.mxu0 0.0
  %126 = vmatprep.subr.mxu0 0.0
  %127 = vmatpush1.msra.mxu0 0.0
  %128 = vmatprep.subr.mxu0 0.0
  %129 = vmatpush1.msra.mxu0 0.0
  %130 = vmatprep.subr.mxu0 0.0
  %131 = vmatpush1.msra.mxu0 0.0
  %132 = vmatprep.subr.mxu0 0.0
  %133 = vmatpush1.msra.mxu0 0.0
  %134 = vmatprep.subr.mxu0 0.0
  %135 = vmatpush1.msra.mxu0 0.0
  %136 = vmatprep.subr.mxu0 0.0
  %137 = vmatpush1.msra.mxu0 0.0
  %138 = vmatprep.subr.mxu0 0.0
  %139 = vmatpush1.msra.mxu0 0.0
  %140 = vmatprep.subr.mxu0 0.0
  %141 = vmatpush1.msra.mxu0 0.0
  %142 = vmatprep.subr.mxu0 0.0
  %143 = vmatpush1.msra.mxu0 0.0
  %144 = vmatprep.mubr.f32.mxu0 0.0
  %145 = vmatmul.mubr.f32.gmra.mrb[0].mxu0 %v33
  %v146 = vpop.f32.mrb[0].mxu0
  %v147 = vadd.f32 0.0, %v146
  %v148 = vpop.f32.mrb[0].mxu0
  %149 = vmatprep.mubr.f32.mxu0 0.0
  %150 = vmatmul.mubr.f32.gmra.mrb[0].mxu0 %v36
  %v151 = vpop.f32.mrb[0].mxu0
  %v152 = vadd.f32 0.0, %v151
  %v153 = vpop.f32.mrb[0].mxu0
  %154 = vmatprep.mubr.f32.mxu0 0.0
  %155 = vmatmul.mubr.f32.gmra.mrb[0].mxu0 %v39
  %v156 = vpop.f32.mrb[0].mxu0
  %v157 = vadd.f32 0.0, %v156
  %v158 = vpop.f32.mrb[0].mxu0
  %159 = vmatprep.mubr.f32.mxu0 0.0
  %160 = vmatmul.mubr.f32.gmra.mrb[0].mxu0 %v42
  %v161 = vpop.f32.mrb[0].mxu0
  %v162 = vadd.f32 0.0, %v161
  %v163 = vpop.f32.mrb[0].mxu0
  %164 = vmatprep.mubr.f32.mxu0 0.0
  %165 = vmatmul.mubr.f32.gmra.mrb[0].mxu0 %v45
  %v166 = vpop.f32.mrb[0].mxu0
  %v167 = vadd.f32 0.0, %v166
  %v168 = vpop.f32.mrb[0].mxu0
  %169 = vmatprep.mubr.f32.mxu0 0.0
  %170 = vmatmul.mubr.f32.gmra.mrb[0].mxu0 %v48
  %v171 = vpop.f32.mrb[0].mxu0
  %v172 = vadd.f32 0.0, %v171
  %v173 = vpop.f32.mrb[0].mxu0
  %174 = vmatprep.mubr.f32.mxu0 0.0
  %175 = vmatmul.mubr.f32.gmra.mrb[0].mxu0 %v51
  %v176 = vpop.f32.mrb[0].mxu0
  %v177 = vadd.f32 0.0, %v176
  %v178 = vpop.f32.mrb[0].mxu0
  %179 = vmatprep.mubr.f32.mxu0 0.0
  %180 = vmatmul.mubr.f32.gmra.mrb[0].mxu0 %v54
  %v181 = vpop.f32.mrb[0].mxu0
  %v182 = vadd.f32 0.0, %v181
  %v183 = vpop.f32.mrb[0].mxu0
  %184 = vmatprep.mubr.f32.mxu0 0.0
  %185 = vmatmul.mubr.f32.gmra.mrb[0].mxu0 %v57
  %v186 = vpop.f32.mrb[0].mxu0
  %v187 = vadd.f32 0.0, %v186
  %v188 = vpop.f32.mrb[0].mxu0
  %189 = vmatprep.mubr.f32.mxu0 0.0
  %190 = vmatmul.mubr.f32.gmra.mrb[0].mxu0 %v60
  %v191 = vpop.f32.mrb[0].mxu0
  %v192 = vadd.f32 0.0, %v191
  %v193 = vpop.f32.mrb[0].mxu0
  %194 = vmatprep.mubr.f32.mxu0 0.0
  %195 = vmatmul.mubr.f32.gmra.mrb[0].mxu0 %v63
  %v196 = vpop.f32.mrb[0].mxu0
  %v197 = vadd.f32 0.0, %v196
  %v198 = vpop.f32.mrb[0].mxu0
  %199 = vmatprep.mubr.f32.mxu0 0.0
  %200 = vmatmul.mubr.f32.gmra.mrb[0].mxu0 %v66
  %v201 = vpop.f32.mrb[0].mxu0
  %v202 = vadd.f32 0.0, %v201
  %v203 = vpop.f32.mrb[0].mxu0
  %204 = vmatprep.mubr.f32.mxu0 0.0
  %205 = vmatmul.mubr.f32.gmra.mrb[0].mxu0 %v69
  %v206 = vpop.f32.mrb[0].mxu0
  %v207 = vadd.f32 0.0, %v206
  %v208 = vpop.f32.mrb[0].mxu0
  %209 = vmatprep.mubr.f32.mxu0 0.0
  %210 = vmatmul.mubr.f32.gmra.mrb[0].mxu0 %v72
  %v211 = vpop.f32.mrb[0].mxu0
  %v212 = vadd.f32 0.0, %v211
  %v213 = vpop.f32.mrb[0].mxu0
  %214 = vmatprep.mubr.f32.mxu0 0.0
  %215 = vmatmul.mubr.f32.gmra.mrb[0].mxu0 %v75
  %v216 = vpop.f32.mrb[0].mxu0
  %v217 = vadd.f32 0.0, %v216
  %v218 = vpop.f32.mrb[0].mxu0
  %219 = vmatprep.mubr.f32.mxu0 0.0
  %220 = vmatmul.mubr.f32.gmra.mrb[0].mxu0 %v78
  %v221 = vpop.f32.mrb[0].mxu0
  %v222 = vadd.f32 0.0, %v221
  %v223 = vpop.f32.mrb[0].mxu0
  %224 = vdwg.mxu0
  %v225 = vmax.f32 %v147, 0.0
  %v226 = vmax.f32 %v152, 0.0
  %v227 = vmax.f32 %v157, 0.0
  %v228 = vmax.f32 %v162, 0.0
  %v229 = vmax.f32 %v167, 0.0
  %v230 = vmax.f32 %v172, 0.0
  %v231 = vmax.f32 %v177, 0.0
  %v232 = vmax.f32 %v182, 0.0
  %v233 = vmax.f32 %v187, 0.0
  %v234 = vmax.f32 %v192, 0.0
  %v235 = vmax.f32 %v197, 0.0
  %v236 = vmax.f32 %v202, 0.0
  %v237 = vmax.f32 %v207, 0.0
  %v238 = vmax.f32 %v212, 0.0
  %v239 = vmax.f32 %v217, 0.0
  %v240 = vmax.f32 %v222, 0.0
  %v241 = vld [vmem:[%s2] sm:$0xff]
  %v242 = vld [vmem:[%s2 + $0x8] sm:$0xff]
  %v243 = vld [vmem:[%s2 + $0x10] sm:$0xff]
  %v244 = vld [vmem:[%s2 + $0x18] sm:$0xff]
  %v245 = vld [vmem:[%s2 + $0x20] sm:$0xff]
  %v246 = vld [vmem:[%s2 + $0x28] sm:$0xff]
  %v247 = vld [vmem:[%s2 + $0x30] sm:$0xff]
  %v248 = vld [vmem:[%s2 + $0x38] sm:$0xff]
  %v249 = vld [vmem:[%s2 + $0x40] sm:$0xff]
  %v250 = vld [vmem:[%s2 + $0x48] sm:$0xff]
  %v251 = vld [vmem:[%s2 + $0x50] sm:$0xff]
  %v252 = vld [vmem:[%s2 + $0x58] sm:$0xff]
  %v253 = vld [vmem:[%s2 + $0x60] sm:$0xff]
  %v254 = vld [vmem:[%s2 + $0x68] sm:$0xff]
  %v255 = vld [vmem:[%s2 + $0x70] sm:$0xff]
  %v256 = vld [vmem:[%s2 + $0x78] sm:$0xff]
  %257 = vmatprep.subr.mxu0 0.0
  %258 = vmatpush1.msra.mxu0 %v241
  %259 = vmatprep.subr.mxu0 0.0
  %260 = vmatpush1.msra.mxu0 %v242
  %261 = vmatprep.subr.mxu0 0.0
  %262 = vmatpush1.msra.mxu0 %v243
  %263 = vmatprep.subr.mxu0 0.0
  %264 = vmatpush1.msra.mxu0 %v244
  %265 = vmatprep.subr.mxu0 0.0
  %266 = vmatpush1.msra.mxu0 %v245
  %267 = vmatprep.subr.mxu0 0.0
  %268 = vmatpush1.msra.mxu0 %v246
  %269 = vmatprep.subr.mxu0 0.0
  %270 = vmatpush1.msra.mxu0 %v247
  %271 = vmatprep.subr.mxu0 0.0
  %272 = vmatpush1.msra.mxu0 %v248
  %273 = vmatprep.subr.mxu0 0.0
  %274 = vmatpush1.msra.mxu0 %v249
  %275 = vmatprep.subr.mxu0 0.0
  %276 = vmatpush1.msra.mxu0 %v250
  %277 = vmatprep.subr.mxu0 0.0
  %278 = vmatpush1.msra.mxu0 %v251
  %279 = vmatprep.subr.mxu0 0.0
  %280 = vmatpush1.msra.mxu0 %v252
  %281 = vmatprep.subr.mxu0 0.0
  %282 = vmatpush1.msra.mxu0 %v253
  %283 = vmatprep.subr.mxu0 0.0
  %284 = vmatpush1.msra.mxu0 %v254
  %285 = vmatprep.subr.mxu0 0.0
  %286 = vmatpush1.msra.mxu0 %v255
  %287 = vmatprep.subr.mxu0 0.0
  %288 = vmatpush1.msra.mxu0 %v256
  %289 = vmatprep.subr.mxu0 0.0
  %290 = vmatpush1.msra.mxu0 0.0
  %291 = vmatprep.subr.mxu0 0.0
  %292 = vmatpush1.msra.mxu0 0.0
  %293 = vmatprep.subr.mxu0 0.0
  %294 = vmatpush1.msra.mxu0 0.0
  %295 = vmatprep.subr.mxu0 0.0
  %296 = vmatpush1.msra.mxu0 0.0
  %297 = vmatprep.subr.mxu0 0.0
  %298 = vmatpush1.msra.mxu0 0.0
  %299 = vmatprep.subr.mxu0 0.0
  %300 = vmatpush1.msra.mxu0 0.0
  %301 = vmatprep.subr.mxu0 0.0
  %302 = vmatpush1.msra.mxu0 0.0
  %303 = vmatprep.subr.mxu0 0.0
  %304 = vmatpush1.msra.mxu0 0.0
  %305 = vmatprep.subr.mxu0 0.0
  %306 = vmatpush1.msra.mxu0 0.0
  %307 = vmatprep.subr.mxu0 0.0
  %308 = vmatpush1.msra.mxu0 0.0
  %309 = vmatprep.subr.mxu0 0.0
  %310 = vmatpush1.msra.mxu0 0.0
  %311 = vmatprep.subr.mxu0 0.0
  %312 = vmatpush1.msra.mxu0 0.0
  %313 = vmatprep.subr.mxu0 0.0
  %314 = vmatpush1.msra.mxu0 0.0
  %315 = vmatprep.subr.mxu0 0.0
  %316 = vmatpush1.msra.mxu0 0.0
  %317 = vmatprep.subr.mxu0 0.0
  %318 = vmatpush1.msra.mxu0 0.0
  %319 = vmatprep.subr.mxu0 0.0
  %320 = vmatpush1.msra.mxu0 0.0
  %321 = vmatprep.mubr.f32.mxu0 0.0
  %322 = vmatmul.mubr.f32.gmra.mrb[0].mxu0 %v225
  %v323 = vpop.f32.mrb[0].mxu0
  %v324 = vadd.f32 0.0, %v323
  %v325 = vpop.f32.mrb[0].mxu0
  %326 = vmatprep.mubr.f32.mxu0 0.0
  %327 = vmatmul.mubr.f32.gmra.mrb[0].mxu0 %v226
  %v328 = vpop.f32.mrb[0].mxu0
  %v329 = vadd.f32 0.0, %v328
  %v330 = vpop.f32.mrb[0].mxu0
  %331 = vmatprep.mubr.f32.mxu0 0.0
  %332 = vmatmul.mubr.f32.gmra.mrb[0].mxu0 %v227
  %v333 = vpop.f32.mrb[0].mxu0
  %v334 = vadd.f32 0.0, %v333
  %v335 = vpop.f32.mrb[0].mxu0
  %336 = vmatprep.mubr.f32.mxu0 0.0
  %337 = vmatmul.mubr.f32.gmra.mrb[0].mxu0 %v228
  %v338 = vpop.f32.mrb[0].mxu0
  %v339 = vadd.f32 0.0, %v338
  %v340 = vpop.f32.mrb[0].mxu0
  %341 = vmatprep.mubr.f32.mxu0 0.0
  %342 = vmatmul.mubr.f32.gmra.mrb[0].mxu0 %v229
  %v343 = vpop.f32.mrb[0].mxu0
  %v344 = vadd.f32 0.0, %v343
  %v345 = vpop.f32.mrb[0].mxu0
  %346 = vmatprep.mubr.f32.mxu0 0.0
  %347 = vmatmul.mubr.f32.gmra.mrb[0].mxu0 %v230
  %v348 = vpop.f32.mrb[0].mxu0
  %v349 = vadd.f32 0.0, %v348
  %v350 = vpop.f32.mrb[0].mxu0
  %351 = vmatprep.mubr.f32.mxu0 0.0
  %352 = vmatmul.mubr.f32.gmra.mrb[0].mxu0 %v231
  %v353 = vpop.f32.mrb[0].mxu0
  %v354 = vadd.f32 0.0, %v353
  %v355 = vpop.f32.mrb[0].mxu0
  %356 = vmatprep.mubr.f32.mxu0 0.0
  %357 = vmatmul.mubr.f32.gmra.mrb[0].mxu0 %v232
  %v358 = vpop.f32.mrb[0].mxu0
  %v359 = vadd.f32 0.0, %v358
  %v360 = vpop.f32.mrb[0].mxu0
  %361 = vmatprep.mubr.f32.mxu0 0.0
  %362 = vmatmul.mubr.f32.gmra.mrb[0].mxu0 %v233
  %v363 = vpop.f32.mrb[0].mxu0
  %v364 = vadd.f32 0.0, %v363
  %v365 = vpop.f32.mrb[0].mxu0
  %366 = vmatprep.mubr.f32.mxu0 0.0
  %367 = vmatmul.mubr.f32.gmra.mrb[0].mxu0 %v234
  %v368 = vpop.f32.mrb[0].mxu0
  %v369 = vadd.f32 0.0, %v368
  %v370 = vpop.f32.mrb[0].mxu0
  %371 = vmatprep.mubr.f32.mxu0 0.0
  %372 = vmatmul.mubr.f32.gmra.mrb[0].mxu0 %v235
  %v373 = vpop.f32.mrb[0].mxu0
  %v374 = vadd.f32 0.0, %v373
  %v375 = vpop.f32.mrb[0].mxu0
  %376 = vmatprep.mubr.f32.mxu0 0.0
  %377 = vmatmul.mubr.f32.gmra.mrb[0].mxu0 %v236
  %v378 = vpop.f32.mrb[0].mxu0
  %v379 = vadd.f32 0.0, %v378
  %v380 = vpop.f32.mrb[0].mxu0
  %381 = vmatprep.mubr.f32.mxu0 0.0
  %382 = vmatmul.mubr.f32.gmra.mrb[0].mxu0 %v237
  %v383 = vpop.f32.mrb[0].mxu0
  %v384 = vadd.f32 0.0, %v383
  %v385 = vpop.f32.mrb[0].mxu0
  %386 = vmatprep.mubr.f32.mxu0 0.0
  %387 = vmatmul.mubr.f32.gmra.mrb[0].mxu0 %v238
  %v388 = vpop.f32.mrb[0].mxu0
  %v389 = vadd.f32 0.0, %v388
  %v390 = vpop.f32.mrb[0].mxu0
  %391 = vmatprep.mubr.f32.mxu0 0.0
  %392 = vmatmul.mubr.f32.gmra.mrb[0].mxu0 %v239
  %v393 = vpop.f32.mrb[0].mxu0
  %v394 = vadd.f32 0.0, %v393
  %v395 = vpop.f32.mrb[0].mxu0
  %396 = vmatprep.mubr.f32.mxu0 0.0
  %397 = vmatmul.mubr.f32.gmra.mrb[0].mxu0 %v240
  %v398 = vpop.f32.mrb[0].mxu0
  %v399 = vadd.f32 0.0, %v398
  %v400 = vpop.f32.mrb[0].mxu0
  %401 = vdwg.mxu0
  %v402 = vmax.f32 %v324, 0.0
  %v403 = vmax.f32 %v329, 0.0
  %v404 = vmax.f32 %v334, 0.0
  %v405 = vmax.f32 %v339, 0.0
  %v406 = vmax.f32 %v344, 0.0
  %v407 = vmax.f32 %v349, 0.0
  %v408 = vmax.f32 %v354, 0.0
  %v409 = vmax.f32 %v359, 0.0
  %v410 = vmax.f32 %v364, 0.0
  %v411 = vmax.f32 %v369, 0.0
  %v412 = vmax.f32 %v374, 0.0
  %v413 = vmax.f32 %v379, 0.0
  %v414 = vmax.f32 %v384, 0.0
  %v415 = vmax.f32 %v389, 0.0
  %v416 = vmax.f32 %v394, 0.0
  %v417 = vmax.f32 %v399, 0.0
  %v418 = vmax.f32 %v402, %v410
  %v419 = vmax.f32 %v403, %v411
  %v420 = vmax.f32 %v404, %v412
  %v421 = vmax.f32 %v405, %v413
  %v422 = vmax.f32 %v406, %v414
  %v423 = vmax.f32 %v407, %v415
  %v424 = vmax.f32 %v408, %v416
  %v425 = vmax.f32 %v409, %v417
  %v426 = vmax.f32 %v418, %v422
  %v427 = vmax.f32 %v419, %v423
  %v428 = vmax.f32 %v420, %v424
  %v429 = vmax.f32 %v421, %v425
  %v430 = vmax.f32 %v426, %v428
  %v431 = vmax.f32 %v427, %v429
  %432 = vst [vmem:[%s3] sm:$0xff] %v430
  %433 = vst [vmem:[%s3 + $0x8] sm:$0xff] %v431
  // Predicated region
  $region14: #{_lambda_.1} parent=0 // pred_check
    _
  $region15: #{_lambda_.1} parent=0 // pred_check_branch
    %435 = sbr.rel (0) target = $region17
  $region16: #{_lambda_.1} parent=0 // pred_region
    _
  $region17: #{_lambda_.1} parent=0 // pred_fallthru
    _
  // Predicated region
  $region18: #{_lambda_.1} parent=0 // pred_check
    _
  $region19: #{_lambda_.1} parent=0 // pred_check_branch
    %437 = sbr.rel (0) target = $region21
  $region20: #{_lambda_.1} parent=0 // pred_region
    _
  $region21: #{_lambda_.1} parent=0 // pred_fallthru
    _

</llo_original>
